<compile_context>
chip_gen: v7x
topology: tpu7x:2x2x1
jax: 0.10.0
libtpu: 0.0.40
codegen_flags: <defaults>
</compile_context>

<pallas_src>
import functools

import jax
import jax.numpy as jnp
import numpy as np
from jax import lax
from jax.experimental import pallas as pl
from jax.experimental.pallas import tpu as pltpu

LANE = 128                       # output channels padded to a lane multiple
SUB = 16                         # sublane multiple safe for bf16-packed tiles
_SINGLE_BUF_MIN_BYTES = 1 << 20  # only single-buffer "big" constant operands


def _round_up(a, b):
    return ((a + b - 1) // b) * b


def _tpu_limits():
    """(VMEM budget bytes, #TensorCores sharing the grid) - generation aware."""
    kind = ""
    try:
        kind = jax.devices()[0].device_kind.lower()
    except Exception:
        pass
    vmem = None
    try:
        vmem = int(pltpu.get_tpu_info().vmem_capacity_bytes)
    except Exception:
        vmem = None
    if vmem is None:
        # v4/v5e/v5p/v6e have 128 MiB physical VMEM; v7x (and unknown) 64 MiB.
        big = any(t in kind for t in ("v4", "v5", "v6"))
        vmem = (128 if big else 64) * 1024 * 1024
    num_tc = 2 if any(t in kind for t in ("v4", "v5p", "7")) else 1
    return (vmem * 3) // 4, num_tc   # ~48 MiB budget on v7x, ~96 MiB on v5e/v6e


def _const_spec(shape, index_map, nbytes):
    """BlockSpec for a grid-invariant operand.  Large constants (folded weight)
    are single-buffered so they do not eat 2x VMEM; tiny ones keep defaults."""
    if nbytes >= _SINGLE_BUF_MIN_BYTES:
        try:
            return pl.BlockSpec(shape, index_map, pipeline_mode=pl.Buffered(1))
        except Exception:            # older Pallas without pipeline_mode
            pass
    return pl.BlockSpec(shape, index_map)


# ----------------------------- Pallas kernels ------------------------------ #

def _matmul_bn_relu_kernel(x_ref, w_ref, shift_ref, o_ref, *, self_residual):
    # x_ref:(tm,Kp) bf16   w_ref:(Kp,Cp) bf16 (BN scale folded)   shift:(1,Cp) f32
    y = jnp.dot(x_ref[...], w_ref[...], preferred_element_type=jnp.float32)
    y = jnp.maximum(y + shift_ref[...], 0.0)
    if self_residual:
        # 1x1 / stride-1: the channel-padded matmul LHS *is* the identity
        # (padding lanes are zero), so the residual costs no extra stream.
        y = y + x_ref[...].astype(jnp.float32)
    o_ref[...] = y.astype(o_ref.dtype)


def _matmul_bn_relu_res_kernel(x_ref, w_ref, shift_ref, res_ref, o_ref):
    # Fallback residual path: identity arrives as an UNPADDED (tm, Cin) bf16
    # stream; only the first Cin output lanes need the add (padded lanes are
    # sliced off in the wrapper), done via a second (masked) store.
    y = jnp.dot(x_ref[...], w_ref[...], preferred_element_type=jnp.float32)
    y = jnp.maximum(y + shift_ref[...], 0.0)
    cin = res_ref.shape[-1]
    o_ref[...] = y.astype(o_ref.dtype)
    o_ref[:, pl.ds(0, cin)] = (y[:, :cin]
                               + res_ref[...].astype(jnp.float32)).astype(o_ref.dtype)


def _fused_conv_bn_relu_kernel(x_ref, w_ref, shift_ref, o_ref, acc_ref, *,
                               k, pad, tho, wop, cin, residual):
    # Direct (im2col-free) kxk stride-1 conv: the whole spatially padded image
    # stays resident in VMEM across the row tiles of one batch element and the
    # conv is an accumulation of k*k shifted (tho*wop, Cin) x (Cin, Cp) matmuls.
    #   x_ref:(1,Hp,Wp,Cin) bf16   w_ref:(k*k,Cin,Cp) bf16   shift:(1,Cp) f32
    #   o_ref:(1, tho*wop, Cp)     acc_ref:(tho*wop, Cp) f32 scratch
    row0 = pl.program_id(1) * tho
    acc_ref[...] = jnp.zeros_like(acc_ref)
    for ki in range(k):
        for kj in range(k):
            lhs = x_ref[0, pl.ds(row0 + ki, tho), pl.ds(kj, wop), :]
            acc_ref[...] += jnp.dot(lhs.reshape(tho * wop, cin),
                                    w_ref[ki * k + kj],
                                    preferred_element_type=jnp.float32)
    y = jnp.maximum(acc_ref[...] + shift_ref[...], 0.0)
    if residual:
        # Identity is re-read from the already-resident padded image (no extra
        # HBM stream).  Numerics: identity is bf16 (vs exact f32 in PyTorch).
        ident = x_ref[0, pl.ds(row0 + pad, tho), pl.ds(pad, wop), :]
        ident = ident.reshape(tho * wop, cin).astype(jnp.float32)
        if cin == y.shape[-1]:
            o_ref[0, :, :] = (y + ident).astype(o_ref.dtype)
        else:
            # Padded output lanes (>= Cout) are sliced off in the wrapper, so
            # the identity only needs the first Cin lanes (masked 2nd store).
            o_ref[0, :, :] = y.astype(o_ref.dtype)
            o_ref[0, :, pl.ds(0, cin)] = (y[:, :cin] + ident).astype(o_ref.dtype)
    else:
        o_ref[0, :, :] = y.astype(o_ref.dtype)


# ------------------------- parameter preparation --------------------------- #

def prepare_conv_layer_params(weight, gamma, beta, running_mean, running_var,
                              *, kernel_size=1, stride=1, eps=1e-5):
    """Fold eval-mode BatchNorm into the conv weight and pre-lay-out for the
    Pallas kernels.  Parameter-only work: call ONCE per parameter set and reuse
    across forward calls (hoisted out of the per-step jit).  kernel_size/stride
    must match the values later passed to conv_layer_apply."""
    weight = jnp.asarray(weight, jnp.float32)
    cout, cin, kh, kw = weight.shape
    assert kh == kw == kernel_size
    scale = jnp.asarray(gamma, jnp.float32) / jnp.sqrt(
        jnp.asarray(running_var, jnp.float32) + eps)
    shift = jnp.asarray(beta, jnp.float32) - jnp.asarray(running_mean, jnp.float32) * scale
    cp = _round_up(cout, LANE)

    # (Cout,Cin,kh,kw) -> (kh,kw,Cin,Cout) with BN scale folded into the output
    # channel columns; Cout padded up to a lane multiple (lane-dense stores).
    w_hwio = jnp.transpose(weight, (2, 3, 1, 0)) * scale
    params = {"shift": jnp.pad(shift, (0, cp - cout)).reshape(1, cp)}

    kk = kernel_size * kernel_size * cin
    kp = _round_up(kk, LANE)
    params["w_mm"] = jnp.pad(w_hwio.reshape(kk, cout),
                             ((0, kp - kk), (0, cp - cout))).astype(jnp.bfloat16)
    if kernel_size > 1 and stride == 1:
        # Layout for the fused (im2col-free) kernel: one (Cin, Cp) slab per tap.
        params["w_fused"] = jnp.pad(
            w_hwio.reshape(kernel_size * kernel_size, cin, cout),
            ((0, 0), (0, 0), (0, cp - cout))).astype(jnp.bfloat16)
    return params


# ------------------------------ path helpers -------------------------------- #

def _fused_row_tile(*, h, w, cin, cp, k, padding, ho, wo, n, out_isz,
                    vmem_budget, num_tc, target_rows=512):
    """Pick the output-row tile for the fused path, or None if it can't fit."""
    wop = _round_up(wo, 8)           # extra columns (zero input) sliced off later
    hp = h + 2 * padding
    wp = w + 2 * padding + (wop - wo)
    img_bytes = hp * wp * cin * 2                    # bf16, double-buffered
    w_bytes = k * k * cin * cp * 2                   # single-buffered when large
    fixed = 2 * img_bytes + w_bytes + 2 * cp * 4 + (2 << 20)

    def tile_bytes(d):
        return d * wop * cp * (4 + 2 * out_isz)      # f32 acc + 2x output buffer

    valid = [d for d in range(1, ho + 1)
             if ho % d == 0 and fixed + tile_bytes(d) <= vmem_budget]
    if not valid:
        # TODO(synk): W-tiling / manual halo DMA for images too large to keep
        # resident in VMEM; falls back to the im2col path today.
        return None
    pref = [d for d in valid if d * wop <= target_rows] or [min(valid)]
    tho = max(pref)
    if n * (ho // tho) < num_tc:                     # keep all TensorCores busy
        smaller = [d for d in pref if n * (ho // d) >= num_tc]
        if smaller:
            tho = max(smaller)
    return tho, wop


def _fused_conv(x_nhwc, w_fused, shift, *, k, padding, ho, wo, cin, cp,
                residual, out_dtype, tho, wop, vmem_budget):
    n, h, w, _ = x_nhwc.shape
    hp = h + 2 * padding
    wp = w + 2 * padding + (wop - wo)
    # Spatial zero-pad: border-only new data (<< the k^2 im2col expansion the
    # previous version wrote to and re-read from HBM).
    xp = jnp.pad(x_nhwc, ((0, 0), (padding, padding),
                          (padding, padding + (wop - wo)), (0, 0)))
    rows = tho * wop
    kern = functools.partial(_fused_conv_bn_relu_kernel, k=k, pad=padding,
                             tho=tho, wop=wop, cin=cin, residual=residual)
    w_spec = _const_spec((k * k, cin, cp), lambda b, t: (0, 0, 0),
                         k * k * cin * cp * 2)
    s_spec = _const_spec((1, cp), lambda b, t: (0, 0), cp * 4)
    return pl.pallas_call(
        kern,
        out_shape=jax.ShapeDtypeStruct((n, ho * wop, cp), out_dtype),
        grid=(n, ho // tho),
        in_specs=[pl.BlockSpec((1, hp, wp, cin), lambda b, t: (b, 0, 0, 0)),
                  w_spec, s_spec],
        out_specs=pl.BlockSpec((1, rows, cp), lambda b, t: (b, t, 0)),
        scratch_shapes=[pltpu.VMEM((rows, cp), jnp.float32)],
        compiler_params=pltpu.CompilerParams(
            dimension_semantics=("parallel", "parallel"),
            vmem_limit_bytes=int(vmem_budget)),
    )(xp, w_fused, shift)


def _im2col_nhwc(x_nhwc, k, stride, padding):
    """(N,H,W,C) -> (N*Ho*Wo, k*k*C) in bf16, column order (ki, kj, c).
    Fallback only (stride>1, 1x1 with padding, or fused VMEM overflow)."""
    n, h, w, c = x_nhwc.shape
    xp = jnp.pad(x_nhwc, ((0, 0), (padding, padding), (padding, padding), (0, 0)))
    ho = (h + 2 * padding - k) // stride + 1
    wo = (w + 2 * padding - k) // stride + 1
    patches = [xp[:, i:i + stride * ho:stride, j:j + stride * wo:stride, :]
               for i in range(k) for j in range(k)]
    return jnp.concatenate(patches, axis=-1).reshape(n * ho * wo, k * k * c)


def _matmul_conv(x_nhwc, w_mm, shift, *, k, stride, padding, cin, cp, residual,
                 out_dtype, tm, vmem_budget, num_tc, m):
    if k == 1 and padding == 0:
        xs = x_nhwc[:, ::stride, ::stride, :] if stride > 1 else x_nhwc
        cols = xs.reshape(m, cin)                    # 1x1: pure reshape, no copy
    else:
        cols = _im2col_nhwc(x_nhwc, k, stride, padding)
    kk = cols.shape[1]
    kp = w_mm.shape[0]
    cols_p = jnp.pad(cols, ((0, 0), (0, kp - kk)))   # stays bf16
    self_res = residual and k == 1 and padding == 0  # LHS doubles as identity
    sep_res = residual and not self_res
    assert not self_res or kp == cp
    out_isz = np.dtype(out_dtype).itemsize

    def vmem_bytes(t):
        b = 2 * t * kp * 2                 # LHS strip (bf16, double-buffered)
        b += kp * cp * 2 + cp * 4          # folded weight + shift (single buffer)
        b += 2 * t * cp * out_isz          # output (double-buffered)
        if sep_res:
            b += 2 * t * cin * 2           # unpadded bf16 identity stream
        return b

    tm_eff = min(tm, m)
    if num_tc > 1 and m > SUB:             # >=1 tile per TensorCore (v7x/megacore);
        tm_eff = min(tm_eff, max(SUB, _round_up(pl.cdiv(m, num_tc), SUB)))
    # single-core chips keep one big tile for small M (no pointless split).
    # TODO(synk): for extremely large K*Cp add a trailing "arbitrary" K grid axis
    # with an f32 VMEM accumulator instead of shrinking tm.
    while vmem_bytes(tm_eff) > vmem_budget and tm_eff > SUB:
        tm_eff = max(SUB, _round_up(tm_eff // 2, SUB))

    # Ragged last M tile: out-of-range rows read garbage through the MXU and are
    # dropped (masked) on store -- do not reduce over those rows.
    grid = (pl.cdiv(m, tm_eff),)
    x_spec = pl.BlockSpec((tm_eff, kp), lambda i: (i, 0))
    w_spec = _const_spec((kp, cp), lambda i: (0, 0), kp * cp * 2)
    s_spec = _const_spec((1, cp), lambda i: (0, 0), cp * 4)
    o_spec = pl.BlockSpec((tm_eff, cp), lambda i: (i, 0))
    cparams = pltpu.CompilerParams(dimension_semantics=("parallel",),
                                   vmem_limit_bytes=int(vmem_budget))
    out_shape = jax.ShapeDtypeStruct((m, cp), out_dtype)

    if sep_res:
        res = x_nhwc.reshape(m, cin)       # unpadded bf16 identity, no extra copy
        res_spec = pl.BlockSpec((tm_eff, cin), lambda i: (i, 0))
        return pl.pallas_call(
            _matmul_bn_relu_res_kernel, out_shape=out_shape, grid=grid,
            in_specs=[x_spec, w_spec, s_spec, res_spec], out_specs=o_spec,
            compiler_params=cparams,
        )(cols_p, w_mm, shift, res)
    kern = functools.partial(_matmul_bn_relu_kernel, self_residual=self_res)
    return pl.pallas_call(
        kern, out_shape=out_shape, grid=grid,
        in_specs=[x_spec, w_spec, s_spec], out_specs=o_spec,
        compiler_params=cparams,
    )(cols_p, w_mm, shift)


# --------------------------------- forward ---------------------------------- #

@functools.partial(jax.jit, static_argnames=("kernel_size", "stride", "padding",
                                              "cout", "out_dtype", "tm"))
def conv_layer_apply(x_nchw, params, *, kernel_size, stride=1, padding=0, cout,
                     out_dtype=jnp.float32, tm=512):
    """relu(bn(conv(x))) [+ x when stride==1 and Cin==Cout], NCHW in/out."""
    n, cin, h, w = x_nchw.shape
    k = kernel_size
    ho = (h + 2 * padding - k) // stride + 1
    wo = (w + 2 * padding - k) // stride + 1
    residual = (stride == 1) and (cin == cout)
    if residual and (ho, wo) != (h, w):
        raise ValueError("residual branch needs output spatial dims == input "
                         "(the PyTorch Conv_Layer would fail to broadcast here)")

    vmem_budget, num_tc = _tpu_limits()
    cp = params["shift"].shape[1]
    out_isz = np.dtype(out_dtype).itemsize

    # Single NCHW->NHWC layout pass straight to bf16 (halves activation traffic;
    # the MXU consumes bf16 anyway).
    # TODO(synk): when stacking Conv_Layers keep activations NHWC/channel-padded
    # between layers so this transpose and the final slice/transpose disappear.
    x_nhwc = jnp.transpose(x_nchw, (0, 2, 3, 1)).astype(jnp.bfloat16)

    plan = None
    if "w_fused" in params:
        plan = _fused_row_tile(h=h, w=w, cin=cin, cp=cp, k=k, padding=padding,
                               ho=ho, wo=wo, n=n, out_isz=out_isz,
                               vmem_budget=vmem_budget, num_tc=num_tc)
    if plan is not None:
        tho, wop = plan
        out_p = _fused_conv(x_nhwc, params["w_fused"], params["shift"], k=k,
                            padding=padding, ho=ho, wo=wo, cin=cin, cp=cp,
                            residual=residual, out_dtype=out_dtype, tho=tho,
                            wop=wop, vmem_budget=vmem_budget)
        out = out_p.reshape(n, ho, wop, cp)[:, :, :wo, :cout]
    else:
        out_p = _matmul_conv(x_nhwc, params["w_mm"], params["shift"], k=k,
                             stride=stride, padding=padding, cin=cin, cp=cp,
                             residual=residual, out_dtype=out_dtype, tm=tm,
                             vmem_budget=vmem_budget, num_tc=num_tc,
                             m=n * ho * wo)
        out = out_p[:, :cout].reshape(n, ho, wo, cout)
    return jnp.transpose(out, (0, 3, 1, 2))          # back to NCHW


def conv_layer_forward(x_nchw, weight, gamma, beta, running_mean, running_var,
                       *, kernel_size=1, stride=1, padding=0, eps=1e-5,
                       out_dtype=jnp.float32, tm=512):
    """One-shot convenience (prepare + apply).  For repeated calls, hoist
    prepare_conv_layer_params() out of the step function."""
    params = prepare_conv_layer_params(weight, gamma, beta, running_mean,
                                       running_var, kernel_size=kernel_size,
                                       stride=stride, eps=eps)
    return conv_layer_apply(x_nchw, params, kernel_size=kernel_size,
                            stride=stride, padding=padding,
                            cout=weight.shape[0], out_dtype=out_dtype, tm=tm)


# ------------------------------ reference ----------------------------------- #

def _reference(x, weight, gamma, beta, mean, var, *, stride, padding, eps=1e-5):
    y = lax.conv_general_dilated(
        x, weight, (stride, stride), [(padding, padding)] * 2,
        dimension_numbers=("NCHW", "OIHW", "NCHW"))
    scale = gamma / jnp.sqrt(var + eps)
    shift = beta - mean * scale
    y = y * scale.reshape(1, -1, 1, 1) + shift.reshape(1, -1, 1, 1)
    y = jnp.maximum(y, 0.0)
    if stride == 1 and x.shape[1] == weight.shape[0]:
        y = x + y
    return y


# --------------------------------- main -------------------------------------- #

def _run_case(key, *, n, cin, cout, h, w, k, stride, padding, name):
    kx, kw_, kg, kb, km, kv = jax.random.split(key, 6)
    x = jax.random.normal(kx, (n, cin, h, w), dtype=jnp.float32)
    weight = jax.random.normal(kw_, (cout, cin, k, k), dtype=jnp.float32) * 0.1
    gamma = 1.0 + 0.1 * jax.random.normal(kg, (cout,), dtype=jnp.float32)
    beta = 0.1 * jax.random.normal(kb, (cout,), dtype=jnp.float32)
    mean = 0.1 * jax.random.normal(km, (cout,), dtype=jnp.float32)
    var = jax.random.uniform(kv, (cout,), minval=0.5, maxval=1.5,
                             dtype=jnp.float32)

    params = prepare_conv_layer_params(weight, gamma, beta, mean, var,
                                       kernel_size=k, stride=stride)
    out = conv_layer_apply(x, params, kernel_size=k, stride=stride,
                           padding=padding, cout=cout)
    out = jax.block_until_ready(out)
    ref = _reference(x, weight, gamma, beta, mean, var,
                     stride=stride, padding=padding)
    if not np.allclose(np.asarray(out), np.asarray(ref), atol=3e-2, rtol=2e-2):
        raise AssertionError(f"Pallas output mismatch for case '{name}'")


if __name__ == "__main__":
    key = jax.random.PRNGKey(0)
    k1, k2, k3 = jax.random.split(key, 3)
    # 1) Conv_Layer defaults: 1x1 / stride 1 / Cin==Cout -> residual branch,
    #    single fused matmul kernel (identity re-used from the matmul LHS).
    _run_case(k1, n=2, cin=4, cout=4, h=16, w=16, k=1, stride=1, padding=0,
              name="1x1 residual")
    # 2) 3x3 / stride 1 "same" conv with residual -> fused im2col-free kernel
    #    (whole padded image resident in VMEM, k^2 shifted matmuls); odd spatial
    #    size also exercises the output-width alignment padding.
    _run_case(k2, n=2, cin=8, cout=8, h=14, w=14, k=3, stride=1, padding=1,
              name="3x3 fused residual")
    # 3) 3x3 / stride 2 downsample (no residual) -> bf16 im2col fallback path.
    _run_case(k3, n=2, cin=4, cout=8, h=16, w=16, k=3, stride=2, padding=1,
              name="3x3 stride-2")
    print("KERNEL_OK")
</pallas_src>

<mosaic_0001>
module attributes {stable_mosaic.version = 11 : i64} {
  func.func @_matmul_bn_relu_kernel(%arg0: i32, %arg1: memref<512x128xbf16, #tpu.memory_space<vmem>>, %arg2: memref<128x128xbf16, #tpu.memory_space<vmem>>, %arg3: memref<1x128xf32, #tpu.memory_space<vmem>>, %arg4: memref<512x128xf32, #tpu.memory_space<vmem>>) attributes {dimension_semantics = [#tpu.dimension_semantics<parallel>], iteration_bounds = array<i64: 1>, scalar_prefetch = 0 : i64, scratch_operands = 0 : i64, tpu.core_type = #tpu.core_type<tc>, window_params = [{transform_indices = @transform_0, window_bounds = array<i64: 512, 128>}, {pipeline_mode = #tpu.pipeline_mode<synchronous>, transform_indices = @transform_1, window_bounds = array<i64: 128, 128>}, {pipeline_mode = #tpu.pipeline_mode<synchronous>, transform_indices = @transform_2, window_bounds = array<i64: 1, 128>}, {transform_indices = @transform_3, window_bounds = array<i64: 512, 128>}]} {
    %c0 = arith.constant 0 : index
    %c0_0 = arith.constant 0 : index
    %0 = vector.load %arg1[%c0, %c0_0] : memref<512x128xbf16, #tpu.memory_space<vmem>>, vector<512x128xbf16>
    %c0_1 = arith.constant 0 : index
    %c0_2 = arith.constant 0 : index
    %1 = vector.load %arg2[%c0_1, %c0_2] : memref<128x128xbf16, #tpu.memory_space<vmem>>, vector<128x128xbf16>
    %cst = arith.constant dense<0.000000e+00> : vector<512x128xf32>
    %2 = tpu.matmul %0, %1, %cst {dimension_numbers = #tpu.dot_dimension_numbers<[1], [0], [0], [1], [0, 0, 1, 1], [], []>} : vector<512x128xbf16>, vector<128x128xbf16>, vector<512x128xf32> -> vector<512x128xf32>
    %c0_3 = arith.constant 0 : index
    %c0_4 = arith.constant 0 : index
    %3 = vector.load %arg3[%c0_3, %c0_4] : memref<1x128xf32, #tpu.memory_space<vmem>>, vector<1x128xf32>
    %4 = vector.broadcast %3 : vector<1x128xf32> to vector<512x128xf32>
    %5 = arith.addf %2, %4 : vector<512x128xf32>
    %cst_5 = arith.constant 0.000000e+00 : f32
    %6 = vector.broadcast %cst_5 : f32 to vector<512x128xf32>
    %7 = arith.maximumf %5, %6 : vector<512x128xf32>
    %c0_6 = arith.constant 0 : index
    %c0_7 = arith.constant 0 : index
    %8 = vector.load %arg1[%c0_6, %c0_7] : memref<512x128xbf16, #tpu.memory_space<vmem>>, vector<512x128xbf16>
    %9 = arith.extf %8 : vector<512x128xbf16> to vector<512x128xf32>
    %10 = arith.addf %7, %9 : vector<512x128xf32>
    %c0_8 = arith.constant 0 : index
    %c0_9 = arith.constant 0 : index
    %11 = vector.load %arg4[%c0_8, %c0_9] : memref<512x128xf32, #tpu.memory_space<vmem>>, vector<512x128xf32>
    tpu.vector_store %arg4[%c0_8, %c0_9], %10 {strides = array<i32>} : memref<512x128xf32, #tpu.memory_space<vmem>>, vector<512x128xf32>,
    return
  }
  func.func @transform_0(%arg0: i32) -> (i32, i32) {
    %c0_i32 = arith.constant 0 : i32
    %c0_i32_0 = arith.constant 0 : i32
    return %arg0, %c0_i32 : i32, i32
  }
  func.func @transform_1(%arg0: i32) -> (i32, i32) {
    %c0_i32 = arith.constant 0 : i32
    %c0_i32_0 = arith.constant 0 : i32
    %c0_i32_1 = arith.constant 0 : i32
    return %c0_i32, %c0_i32_0 : i32, i32
  }
  func.func @transform_2(%arg0: i32) -> (i32, i32) {
    %c0_i32 = arith.constant 0 : i32
    %c0_i32_0 = arith.constant 0 : i32
    %c0_i32_1 = arith.constant 0 : i32
    return %c0_i32, %c0_i32_0 : i32, i32
  }
  func.func @transform_3(%arg0: i32) -> (i32, i32) {
    %c0_i32 = arith.constant 0 : i32
    %c0_i32_0 = arith.constant 0 : i32
    return %arg0, %c0_i32 : i32, i32
  }
}

</mosaic_0001>

<llo_original>
// kernel: conv_layer_apply.1
$region0: #{conv_layer_apply.1}
  #allocation0 [shape = 'u32[]', space=smem, size = 0x4, offset = 0x4, fixed_abs, tag = 'smem constant byte address 0x4 - core index']
  #allocation1 [shape = 'u32[144,128]{1,0:T(1,128)}', space=vmem, size = 0x12000, scoped, tag = 'internal scratch']
  %s0 = inlined_call_operand.vmem [shape: bf16[512,128], index: 0, kind: input, shape index: {}]
  %s1 = inlined_call_operand.vmem [shape: bf16[128,128], index: 1, kind: input, shape index: {}]
  %s2 = inlined_call_operand.vmem [shape: f32[1,128], index: 2, kind: input, shape index: {}]
  %s3 = inlined_call_operand.vmem [shape: f32[512,128], index: 3, kind: output, shape index: {}]
  %s4 = sld [smem:[#allocation0]]
  $region22: #{conv_layer_apply.1} parent=0
    _
  %s6 = ssub.s32 1, %s4
  %s7 = scalar_select 0, %s6, %s4
  // Predicated region
  $region2: #{conv_layer_apply.1} parent=0 // pred_check
    _
  $region3: #{conv_layer_apply.1} parent=0 // pred_check_branch
    %9 = sbr.rel (0) target = $region5
  $region4: #{conv_layer_apply.1} parent=0 // pred_region
    _
  $region5: #{conv_layer_apply.1} parent=0 // pred_fallthru
    _
  // Predicated region
  $region6: #{conv_layer_apply.1} parent=0 // pred_check
    _
  $region7: #{conv_layer_apply.1} parent=0 // pred_check_branch
    %11 = sbr.rel (0) target = $region9
  $region8: #{conv_layer_apply.1} parent=0 // pred_region
    _
  $region9: #{conv_layer_apply.1} parent=0 // pred_fallthru
    _
  // Predicated region
  $region10: #{conv_layer_apply.1} parent=0 // pred_check
    _
  $region11: #{conv_layer_apply.1} parent=0 // pred_check_branch
    %13 = sbr.rel (0) target = $region13
  $region12: #{conv_layer_apply.1} parent=0 // pred_region
    _
  $region13: #{conv_layer_apply.1} parent=0 // pred_fallthru
    _
  %v15 = vld [vmem:[%s0] sm:$0xf]
  %v16 = vld [vmem:[%s0 + $0x4] sm:$0xf]
  %v17 = vld [vmem:[%s0 + $0x8] sm:$0xf]
  %v18 = vld [vmem:[%s0 + $0xc] sm:$0xf]
  %v19 = vld [vmem:[%s0 + $0x10] sm:$0xf]
  %v20 = vld [vmem:[%s0 + $0x14] sm:$0xf]
  %v21 = vld [vmem:[%s0 + $0x18] sm:$0xf]
  %v22 = vld [vmem:[%s0 + $0x1c] sm:$0xf]
  %v23 = vld [vmem:[%s0 + $0x20] sm:$0xf]
  %v24 = vld [vmem:[%s0 + $0x24] sm:$0xf]
  %v25 = vld [vmem:[%s0 + $0x28] sm:$0xf]
  %v26 = vld [vmem:[%s0 + $0x2c] sm:$0xf]
  %v27 = vld [vmem:[%s0 + $0x30] sm:$0xf]
  %v28 = vld [vmem:[%s0 + $0x34] sm:$0xf]
  %v29 = vld [vmem:[%s0 + $0x38] sm:$0xf]
  %v30 = vld [vmem:[%s0 + $0x3c] sm:$0xf]
  %v31 = vld [vmem:[%s0 + $0x40] sm:$0xf]
  %v32 = vld [vmem:[%s0 + $0x44] sm:$0xf]
  %v33 = vld [vmem:[%s0 + $0x48] sm:$0xf]
  %v34 = vld [vmem:[%s0 + $0x4c] sm:$0xf]
  %v35 = vld [vmem:[%s0 + $0x50] sm:$0xf]
  %v36 = vld [vmem:[%s0 + $0x54] sm:$0xf]
  %v37 = vld [vmem:[%s0 + $0x58] sm:$0xf]
  %v38 = vld [vmem:[%s0 + $0x5c] sm:$0xf]
  %v39 = vld [vmem:[%s0 + $0x60] sm:$0xf]
  %v40 = vld [vmem:[%s0 + $0x64] sm:$0xf]
  %v41 = vld [vmem:[%s0 + $0x68] sm:$0xf]
  %v42 = vld [vmem:[%s0 + $0x6c] sm:$0xf]
  %v43 = vld [vmem:[%s0 + $0x70] sm:$0xf]
  %v44 = vld [vmem:[%s0 + $0x74] sm:$0xf]
  %v45 = vld [vmem:[%s0 + $0x78] sm:$0xf]
  %v46 = vld [vmem:[%s0 + $0x7c] sm:$0xf]
  %v47 = vld [vmem:[%s0 + $0x80] sm:$0xf]
  %v48 = vld [vmem:[%s0 + $0x84] sm:$0xf]
  %v49 = vld [vmem:[%s0 + $0x88] sm:$0xf]
  %v50 = vld [vmem:[%s0 + $0x8c] sm:$0xf]
  %v51 = vld [vmem:[%s0 + $0x90] sm:$0xf]
  %v52 = vld [vmem:[%s0 + $0x94] sm:$0xf]
  %v53 = vld [vmem:[%s0 + $0x98] sm:$0xf]
  %v54 = vld [vmem:[%s0 + $0x9c] sm:$0xf]
  %v55 = vld [vmem:[%s0 + $0xa0] sm:$0xf]
  %v56 = vld [vmem:[%s0 + $0xa4] sm:$0xf]
  %v57 = vld [vmem:[%s0 + $0xa8] sm:$0xf]
  %v58 = vld [vmem:[%s0 + $0xac] sm:$0xf]
  %v59 = vld [vmem:[%s0 + $0xb0] sm:$0xf]
  %v60 = vld [vmem:[%s0 + $0xb4] sm:$0xf]
  %v61 = vld [vmem:[%s0 + $0xb8] sm:$0xf]
  %v62 = vld [vmem:[%s0 + $0xbc] sm:$0xf]
  %v63 = vld [vmem:[%s0 + $0xc0] sm:$0xf]
  %v64 = vld [vmem:[%s0 + $0xc4] sm:$0xf]
  %v65 = vld [vmem:[%s0 + $0xc8] sm:$0xf]
  %v66 = vld [vmem:[%s0 + $0xcc] sm:$0xf]
  %v67 = vld [vmem:[%s0 + $0xd0] sm:$0xf]
  %v68 = vld [vmem:[%s0 + $0xd4] sm:$0xf]
  %v69 = vld [vmem:[%s0 + $0xd8] sm:$0xf]
  %v70 = vld [vmem:[%s0 + $0xdc] sm:$0xf]
  %v71 = vld [vmem:[%s0 + $0xe0] sm:$0xf]
  %v72 = vld [vmem:[%s0 + $0xe4] sm:$0xf]
  %v73 = vld [vmem:[%s0 + $0xe8] sm:$0xf]
  %v74 = vld [vmem:[%s0 + $0xec] sm:$0xf]
  %v75 = vld [vmem:[%s0 + $0xf0] sm:$0xf]
  %v76 = vld [vmem:[%s0 + $0xf4] sm:$0xf]
  %v77 = vld [vmem:[%s0 + $0xf8] sm:$0xf]
  %v78 = vld [vmem:[%s0 + $0xfc] sm:$0xf]
  %v79 = vld [vmem:[%s1] sm:$0xf]
  %v80 = vld [vmem:[%s1 + $0x4] sm:$0xf]
  %v81 = vld [vmem:[%s1 + $0x8] sm:$0xf]
  %v82 = vld [vmem:[%s1 + $0xc] sm:$0xf]
  %v83 = vld [vmem:[%s1 + $0x10] sm:$0xf]
  %v84 = vld [vmem:[%s1 + $0x14] sm:$0xf]
  %v85 = vld [vmem:[%s1 + $0x18] sm:$0xf]
  %v86 = vld [vmem:[%s1 + $0x1c] sm:$0xf]
  %v87 = vld [vmem:[%s1 + $0x20] sm:$0xf]
  %v88 = vld [vmem:[%s1 + $0x24] sm:$0xf]
  %v89 = vld [vmem:[%s1 + $0x28] sm:$0xf]
  %v90 = vld [vmem:[%s1 + $0x2c] sm:$0xf]
  %v91 = vld [vmem:[%s1 + $0x30] sm:$0xf]
  %v92 = vld [vmem:[%s1 + $0x34] sm:$0xf]
  %v93 = vld [vmem:[%s1 + $0x38] sm:$0xf]
  %v94 = vld [vmem:[%s1 + $0x3c] sm:$0xf]
  %v95 = vld [vmem:[%s2] sm:$0x1]
  %v97 = vlaneseq
  %v98 = vshrl.u32 %v97, 7
  %v99 = vsub.s32 0, %v98
  %v100 = vrot.slane %v95, %v99
  %v166 = vunpack.c.l.b16 %v15
  %v167 = vunpack.c.l.b16 %v16
  %v168 = vunpack.c.l.b16 %v17
  %v169 = vunpack.c.l.b16 %v18
  %v170 = vunpack.c.l.b16 %v19
  %v171 = vunpack.c.l.b16 %v20
  %v172 = vunpack.c.l.b16 %v21
  %v173 = vunpack.c.l.b16 %v22
  %v174 = vunpack.c.l.b16 %v23
  %v175 = vunpack.c.l.b16 %v24
  %v176 = vunpack.c.l.b16 %v25
  %v177 = vunpack.c.l.b16 %v26
  %v178 = vunpack.c.l.b16 %v27
  %v179 = vunpack.c.l.b16 %v28
  %v180 = vunpack.c.l.b16 %v29
  %v181 = vunpack.c.l.b16 %v30
  %v182 = vunpack.c.l.b16 %v31
  %v183 = vunpack.c.l.b16 %v32
  %v184 = vunpack.c.l.b16 %v33
  %v185 = vunpack.c.l.b16 %v34
  %v186 = vunpack.c.l.b16 %v35
  %v187 = vunpack.c.l.b16 %v36
  %v188 = vunpack.c.l.b16 %v37
  %v189 = vunpack.c.l.b16 %v38
  %v190 = vunpack.c.l.b16 %v39
  %v191 = vunpack.c.l.b16 %v40
  %v192 = vunpack.c.l.b16 %v41
  %v193 = vunpack.c.l.b16 %v42
  %v194 = vunpack.c.l.b16 %v43
  %v195 = vunpack.c.l.b16 %v44
  %v196 = vunpack.c.l.b16 %v45
  %v197 = vunpack.c.l.b16 %v46
  %v198 = vunpack.c.l.b16 %v47
  %v199 = vunpack.c.l.b16 %v48
  %v200 = vunpack.c.l.b16 %v49
  %v201 = vunpack.c.l.b16 %v50
  %v202 = vunpack.c.l.b16 %v51
  %v203 = vunpack.c.l.b16 %v52
  %v204 = vunpack.c.l.b16 %v53
  %v205 = vunpack.c.l.b16 %v54
  %v206 = vunpack.c.l.b16 %v55
  %v207 = vunpack.c.l.b16 %v56
  %v208 = vunpack.c.l.b16 %v57
  %v209 = vunpack.c.l.b16 %v58
  %v210 = vunpack.c.l.b16 %v59
  %v211 = vunpack.c.l.b16 %v60
  %v212 = vunpack.c.l.b16 %v61
  %v213 = vunpack.c.l.b16 %v62
  %v214 = vunpack.c.l.b16 %v63
  %v215 = vunpack.c.l.b16 %v64
  %v216 = vunpack.c.l.b16 %v65
  %v217 = vunpack.c.l.b16 %v66
  %v218 = vunpack.c.l.b16 %v67
  %v219 = vunpack.c.l.b16 %v68
  %v220 = vunpack.c.l.b16 %v69
  %v221 = vunpack.c.l.b16 %v70
  %v222 = vunpack.c.l.b16 %v71
  %v223 = vunpack.c.l.b16 %v72
  %v224 = vunpack.c.l.b16 %v73
  %v225 = vunpack.c.l.b16 %v74
  %v226 = vunpack.c.l.b16 %v75
  %v227 = vunpack.c.l.b16 %v76
  %v228 = vunpack.c.l.b16 %v77
  %v229 = vunpack.c.l.b16 %v78
  %v230 = vpack.c.b16 %v167, %v166
  %v231 = vpack.c.b16 %v169, %v168
  %v232 = vpack.c.b16 %v171, %v170
  %v233 = vpack.c.b16 %v173, %v172
  %v234 = vpack.c.b16 %v175, %v174
  %v235 = vpack.c.b16 %v177, %v176
  %v236 = vpack.c.b16 %v179, %v178
  %v237 = vpack.c.b16 %v181, %v180
  %v238 = vpack.c.b16 %v183, %v182
  %v239 = vpack.c.b16 %v185, %v184
  %v240 = vpack.c.b16 %v187, %v186
  %v241 = vpack.c.b16 %v189, %v188
  %v242 = vpack.c.b16 %v191, %v190
  %v243 = vpack.c.b16 %v193, %v192
  %v244 = vpack.c.b16 %v195, %v194
  %v245 = vpack.c.b16 %v197, %v196
  %v246 = vpack.c.b16 %v199, %v198
  %v247 = vpack.c.b16 %v201, %v200
  %v248 = vpack.c.b16 %v203, %v202
  %v249 = vpack.c.b16 %v205, %v204
  %v250 = vpack.c.b16 %v207, %v206
  %v251 = vpack.c.b16 %v209, %v208
  %v252 = vpack.c.b16 %v211, %v210
  %v253 = vpack.c.b16 %v213, %v212
  %v254 = vpack.c.b16 %v215, %v214
  %v255 = vpack.c.b16 %v217, %v216
  %v256 = vpack.c.b16 %v219, %v218
  %v257 = vpack.c.b16 %v221, %v220
  %v258 = vpack.c.b16 %v223, %v222
  %v259 = vpack.c.b16 %v225, %v224
  %v260 = vpack.c.b16 %v227, %v226
  %v261 = vpack.c.b16 %v229, %v228
  %v310 = vunpack.c.l.b16 %v79
  %v311 = vunpack.c.l.b16 %v80
  %v312 = vunpack.c.l.b16 %v81
  %v313 = vunpack.c.l.b16 %v82
  %v314 = vunpack.c.l.b16 %v83
  %v315 = vunpack.c.l.b16 %v84
  %v316 = vunpack.c.l.b16 %v85
  %v317 = vunpack.c.l.b16 %v86
  %v318 = vunpack.c.l.b16 %v87
  %v319 = vunpack.c.l.b16 %v88
  %v320 = vunpack.c.l.b16 %v89
  %v321 = vunpack.c.l.b16 %v90
  %v322 = vunpack.c.l.b16 %v91
  %v323 = vunpack.c.l.b16 %v92
  %v324 = vunpack.c.l.b16 %v93
  %v325 = vunpack.c.l.b16 %v94
  %v326 = vpack.c.b16 %v311, %v310
  %v327 = vpack.c.b16 %v313, %v312
  %v328 = vpack.c.b16 %v315, %v314
  %v329 = vpack.c.b16 %v317, %v316
  %v330 = vpack.c.b16 %v319, %v318
  %v331 = vpack.c.b16 %v321, %v320
  %v332 = vpack.c.b16 %v323, %v322
  %v333 = vpack.c.b16 %v325, %v324
  %342 = vmatprep.subr.bf16.mxu0 0
  %343 = vmatpush1.bf16.msra.mxu0 %v326
  %344 = vmatprep.subr.bf16.mxu0 0
  %345 = vmatpush1.bf16.msra.mxu0 %v327
  %346 = vmatprep.subr.bf16.mxu0 0
  %347 = vmatpush1.bf16.msra.mxu0 %v328
  %348 = vmatprep.subr.bf16.mxu0 0
  %349 = vmatpush1.bf16.msra.mxu0 %v329
  %350 = vmatprep.subr.bf16.mxu0 0
  %351 = vmatpush1.bf16.msra.mxu0 %v330
  %352 = vmatprep.subr.bf16.mxu0 0
  %353 = vmatpush1.bf16.msra.mxu0 %v331
  %354 = vmatprep.subr.bf16.mxu0 0
  %355 = vmatpush1.bf16.msra.mxu0 %v332
  %356 = vmatprep.subr.bf16.mxu0 0
  %357 = vmatpush1.bf16.msra.mxu0 %v333
  %358 = vmatprep.subr.bf16.mxu0 0
  %359 = vmatpush1.bf16.msra.mxu0 0
  %360 = vmatprep.subr.bf16.mxu0 0
  %361 = vmatpush1.bf16.msra.mxu0 0
  %362 = vmatprep.subr.bf16.mxu0 0
  %363 = vmatpush1.bf16.msra.mxu0 0
  %364 = vmatprep.subr.bf16.mxu0 0
  %365 = vmatpush1.bf16.msra.mxu0 0
  %366 = vmatprep.subr.bf16.mxu0 0
  %367 = vmatpush1.bf16.msra.mxu0 0
  %368 = vmatprep.subr.bf16.mxu0 0
  %369 = vmatpush1.bf16.msra.mxu0 0
  %370 = vmatprep.subr.bf16.mxu0 0
  %371 = vmatpush1.bf16.msra.mxu0 0
  %372 = vmatprep.subr.bf16.mxu0 0
  %373 = vmatpush1.bf16.msra.mxu0 0
  %374 = vmatprep.mubr.bf16.mxu0 0
  %375 = vmatmul.mubr.bf16.gmra.mrb[0].mxu0 %v230
  %v376 = vpop.f32.mrb[0].mxu0
  %v377 = vadd.f32 %v100, %v376
  %v378 = vpop.f32.mrb[0].mxu0
  %v379 = vpop.f32.mrb[0].mxu0
  %v380 = vadd.f32 %v100, %v379
  %v381 = vpop.f32.mrb[0].mxu0
  %382 = vmatprep.mubr.bf16.mxu0 0
  %383 = vmatmul.mubr.bf16.gmra.mrb[0].mxu0 %v231
  %v384 = vpop.f32.mrb[0].mxu0
  %v385 = vadd.f32 %v100, %v384
  %v386 = vpop.f32.mrb[0].mxu0
  %v387 = vpop.f32.mrb[0].mxu0
  %v388 = vadd.f32 %v100, %v387
  %v389 = vpop.f32.mrb[0].mxu0
  %390 = vmatprep.mubr.bf16.mxu0 0
  %391 = vmatmul.mubr.bf16.gmra.mrb[0].mxu0 %v232
  %v392 = vpop.f32.mrb[0].mxu0
  %v393 = vadd.f32 %v100, %v392
  %v394 = vpop.f32.mrb[0].mxu0
  %v395 = vpop.f32.mrb[0].mxu0
  %v396 = vadd.f32 %v100, %v395
  %v397 = vpop.f32.mrb[0].mxu0
  %398 = vmatprep.mubr.bf16.mxu0 0
  %399 = vmatmul.mubr.bf16.gmra.mrb[0].mxu0 %v233
  %v400 = vpop.f32.mrb[0].mxu0
  %v401 = vadd.f32 %v100, %v400
  %v402 = vpop.f32.mrb[0].mxu0
  %v403 = vpop.f32.mrb[0].mxu0
  %v404 = vadd.f32 %v100, %v403
  %v405 = vpop.f32.mrb[0].mxu0
  %406 = vmatprep.mubr.bf16.mxu0 0
  %407 = vmatmul.mubr.bf16.gmra.mrb[0].mxu0 %v234
  %v408 = vpop.f32.mrb[0].mxu0
  %v409 = vadd.f32 %v100, %v408
  %v410 = vpop.f32.mrb[0].mxu0
  %v411 = vpop.f32.mrb[0].mxu0
  %v412 = vadd.f32 %v100, %v411
  %v413 = vpop.f32.mrb[0].mxu0
  %414 = vmatprep.mubr.bf16.mxu0 0
  %415 = vmatmul.mubr.bf16.gmra.mrb[0].mxu0 %v235
  %v416 = vpop.f32.mrb[0].mxu0
  %v417 = vadd.f32 %v100, %v416
  %v418 = vpop.f32.mrb[0].mxu0
  %v419 = vpop.f32.mrb[0].mxu0
  %v420 = vadd.f32 %v100, %v419
  %v421 = vpop.f32.mrb[0].mxu0
  %422 = vmatprep.mubr.bf16.mxu0 0
  %423 = vmatmul.mubr.bf16.gmra.mrb[0].mxu0 %v236
  %v424 = vpop.f32.mrb[0].mxu0
  %v425 = vadd.f32 %v100, %v424
  %v426 = vpop.f32.mrb[0].mxu0
  %v427 = vpop.f32.mrb[0].mxu0
  %v428 = vadd.f32 %v100, %v427
  %v429 = vpop.f32.mrb[0].mxu0
  %430 = vmatprep.mubr.bf16.mxu0 0
  %431 = vmatmul.mubr.bf16.gmra.mrb[0].mxu0 %v237
  %v432 = vpop.f32.mrb[0].mxu0
  %v433 = vadd.f32 %v100, %v432
  %v434 = vpop.f32.mrb[0].mxu0
  %v435 = vpop.f32.mrb[0].mxu0
  %v436 = vadd.f32 %v100, %v435
  %v437 = vpop.f32.mrb[0].mxu0
  %438 = vmatprep.mubr.bf16.mxu0 0
  %439 = vmatmul.mubr.bf16.gmra.mrb[0].mxu0 %v238
  %v440 = vpop.f32.mrb[0].mxu0
  %v441 = vadd.f32 %v100, %v440
  %v442 = vpop.f32.mrb[0].mxu0
  %v443 = vpop.f32.mrb[0].mxu0
  %v444 = vadd.f32 %v100, %v443
  %v445 = vpop.f32.mrb[0].mxu0
  %446 = vmatprep.mubr.bf16.mxu0 0
  %447 = vmatmul.mubr.bf16.gmra.mrb[0].mxu0 %v239
  %v448 = vpop.f32.mrb[0].mxu0
  %v449 = vadd.f32 %v100, %v448
  %v450 = vpop.f32.mrb[0].mxu0
  %v451 = vpop.f32.mrb[0].mxu0
  %v452 = vadd.f32 %v100, %v451
  %v453 = vpop.f32.mrb[0].mxu0
  %454 = vmatprep.mubr.bf16.mxu0 0
  %455 = vmatmul.mubr.bf16.gmra.mrb[0].mxu0 %v240
  %v456 = vpop.f32.mrb[0].mxu0
  %v457 = vadd.f32 %v100, %v456
  %v458 = vpop.f32.mrb[0].mxu0
  %v459 = vpop.f32.mrb[0].mxu0
  %v460 = vadd.f32 %v100, %v459
  %v461 = vpop.f32.mrb[0].mxu0
  %462 = vmatprep.mubr.bf16.mxu0 0
  %463 = vmatmul.mubr.bf16.gmra.mrb[0].mxu0 %v241
  %v464 = vpop.f32.mrb[0].mxu0
  %v465 = vadd.f32 %v100, %v464
  %v466 = vpop.f32.mrb[0].mxu0
  %v467 = vpop.f32.mrb[0].mxu0
  %v468 = vadd.f32 %v100, %v467
  %v469 = vpop.f32.mrb[0].mxu0
  %470 = vmatprep.mubr.bf16.mxu0 0
  %471 = vmatmul.mubr.bf16.gmra.mrb[0].mxu0 %v242
  %v472 = vpop.f32.mrb[0].mxu0
  %v473 = vadd.f32 %v100, %v472
  %v474 = vpop.f32.mrb[0].mxu0
  %v475 = vpop.f32.mrb[0].mxu0
  %v476 = vadd.f32 %v100, %v475
  %v477 = vpop.f32.mrb[0].mxu0
  %478 = vmatprep.mubr.bf16.mxu0 0
  %479 = vmatmul.mubr.bf16.gmra.mrb[0].mxu0 %v243
  %v480 = vpop.f32.mrb[0].mxu0
  %v481 = vadd.f32 %v100, %v480
  %v482 = vpop.f32.mrb[0].mxu0
  %v483 = vpop.f32.mrb[0].mxu0
  %v484 = vadd.f32 %v100, %v483
  %v485 = vpop.f32.mrb[0].mxu0
  %486 = vmatprep.mubr.bf16.mxu0 0
  %487 = vmatmul.mubr.bf16.gmra.mrb[0].mxu0 %v244
  %v488 = vpop.f32.mrb[0].mxu0
  %v489 = vadd.f32 %v100, %v488
  %v490 = vpop.f32.mrb[0].mxu0
  %v491 = vpop.f32.mrb[0].mxu0
  %v492 = vadd.f32 %v100, %v491
  %v493 = vpop.f32.mrb[0].mxu0
  %494 = vmatprep.mubr.bf16.mxu0 0
  %495 = vmatmul.mubr.bf16.gmra.mrb[0].mxu0 %v245
  %v496 = vpop.f32.mrb[0].mxu0
  %v497 = vadd.f32 %v100, %v496
  %v498 = vpop.f32.mrb[0].mxu0
  %v499 = vpop.f32.mrb[0].mxu0
  %v500 = vadd.f32 %v100, %v499
  %v501 = vpop.f32.mrb[0].mxu0
  %502 = vmatprep.mubr.bf16.mxu0 0
  %503 = vmatmul.mubr.bf16.gmra.mrb[0].mxu0 %v246
  %v504 = vpop.f32.mrb[0].mxu0
  %v505 = vadd.f32 %v100, %v504
  %v506 = vpop.f32.mrb[0].mxu0
  %v507 = vpop.f32.mrb[0].mxu0
  %v508 = vadd.f32 %v100, %v507
  %v509 = vpop.f32.mrb[0].mxu0
  %510 = vmatprep.mubr.bf16.mxu0 0
  %511 = vmatmul.mubr.bf16.gmra.mrb[0].mxu0 %v247
  %v512 = vpop.f32.mrb[0].mxu0
  %v513 = vadd.f32 %v100, %v512
  %v514 = vpop.f32.mrb[0].mxu0
  %v515 = vpop.f32.mrb[0].mxu0
  %v516 = vadd.f32 %v100, %v515
  %v517 = vpop.f32.mrb[0].mxu0
  %518 = vmatprep.mubr.bf16.mxu0 0
  %519 = vmatmul.mubr.bf16.gmra.mrb[0].mxu0 %v248
  %v520 = vpop.f32.mrb[0].mxu0
  %v521 = vadd.f32 %v100, %v520
  %v522 = vpop.f32.mrb[0].mxu0
  %v523 = vpop.f32.mrb[0].mxu0
  %v524 = vadd.f32 %v100, %v523
  %v525 = vpop.f32.mrb[0].mxu0
  %526 = vmatprep.mubr.bf16.mxu0 0
  %527 = vmatmul.mubr.bf16.gmra.mrb[0].mxu0 %v249
  %v528 = vpop.f32.mrb[0].mxu0
  %v529 = vadd.f32 %v100, %v528
  %v530 = vpop.f32.mrb[0].mxu0
  %v531 = vpop.f32.mrb[0].mxu0
  %v532 = vadd.f32 %v100, %v531
  %v533 = vpop.f32.mrb[0].mxu0
  %534 = vmatprep.mubr.bf16.mxu0 0
  %535 = vmatmul.mubr.bf16.gmra.mrb[0].mxu0 %v250
  %v536 = vpop.f32.mrb[0].mxu0
  %v537 = vadd.f32 %v100, %v536
  %v538 = vpop.f32.mrb[0].mxu0
  %v539 = vpop.f32.mrb[0].mxu0
  %v540 = vadd.f32 %v100, %v539
  %v541 = vpop.f32.mrb[0].mxu0
  %542 = vmatprep.mubr.bf16.mxu0 0
  %543 = vmatmul.mubr.bf16.gmra.mrb[0].mxu0 %v251
  %v544 = vpop.f32.mrb[0].mxu0
  %v545 = vadd.f32 %v100, %v544
  %v546 = vpop.f32.mrb[0].mxu0
  %v547 = vpop.f32.mrb[0].mxu0
  %v548 = vadd.f32 %v100, %v547
  %v549 = vpop.f32.mrb[0].mxu0
  %550 = vmatprep.mubr.bf16.mxu0 0
  %551 = vmatmul.mubr.bf16.gmra.mrb[0].mxu0 %v252
  %v552 = vpop.f32.mrb[0].mxu0
  %v553 = vadd.f32 %v100, %v552
  %v554 = vpop.f32.mrb[0].mxu0
  %v555 = vpop.f32.mrb[0].mxu0
  %v556 = vadd.f32 %v100, %v555
  %v557 = vpop.f32.mrb[0].mxu0
  %558 = vmatprep.mubr.bf16.mxu0 0
  %559 = vmatmul.mubr.bf16.gmra.mrb[0].mxu0 %v253
  %v560 = vpop.f32.mrb[0].mxu0
  %v561 = vadd.f32 %v100, %v560
  %v562 = vpop.f32.mrb[0].mxu0
  %v563 = vpop.f32.mrb[0].mxu0
  %v564 = vadd.f32 %v100, %v563
  %v565 = vpop.f32.mrb[0].mxu0
  %566 = vmatprep.mubr.bf16.mxu0 0
  %567 = vmatmul.mubr.bf16.gmra.mrb[0].mxu0 %v254
  %v568 = vpop.f32.mrb[0].mxu0
  %v569 = vadd.f32 %v100, %v568
  %v570 = vpop.f32.mrb[0].mxu0
  %v571 = vpop.f32.mrb[0].mxu0
  %v572 = vadd.f32 %v100, %v571
  %v573 = vpop.f32.mrb[0].mxu0
  %574 = vmatprep.mubr.bf16.mxu0 0
  %575 = vmatmul.mubr.bf16.gmra.mrb[0].mxu0 %v255
  %v576 = vpop.f32.mrb[0].mxu0
  %v577 = vadd.f32 %v100, %v576
  %v578 = vpop.f32.mrb[0].mxu0
  %v579 = vpop.f32.mrb[0].mxu0
  %v580 = vadd.f32 %v100, %v579
  %v581 = vpop.f32.mrb[0].mxu0
  %582 = vmatprep.mubr.bf16.mxu0 0
  %583 = vmatmul.mubr.bf16.gmra.mrb[0].mxu0 %v256
  %v584 = vpop.f32.mrb[0].mxu0
  %v585 = vadd.f32 %v100, %v584
  %v586 = vpop.f32.mrb[0].mxu0
  %v587 = vpop.f32.mrb[0].mxu0
  %v588 = vadd.f32 %v100, %v587
  %v589 = vpop.f32.mrb[0].mxu0
  %590 = vmatprep.mubr.bf16.mxu0 0
  %591 = vmatmul.mubr.bf16.gmra.mrb[0].mxu0 %v257
  %v592 = vpop.f32.mrb[0].mxu0
  %v593 = vadd.f32 %v100, %v592
  %v594 = vpop.f32.mrb[0].mxu0
  %v595 = vpop.f32.mrb[0].mxu0
  %v596 = vadd.f32 %v100, %v595
  %v597 = vpop.f32.mrb[0].mxu0
  %598 = vmatprep.mubr.bf16.mxu0 0
  %599 = vmatmul.mubr.bf16.gmra.mrb[0].mxu0 %v258
  %v600 = vpop.f32.mrb[0].mxu0
  %v601 = vadd.f32 %v100, %v600
  %v602 = vpop.f32.mrb[0].mxu0
  %v603 = vpop.f32.mrb[0].mxu0
  %v604 = vadd.f32 %v100, %v603
  %v605 = vpop.f32.mrb[0].mxu0
  %606 = vmatprep.mubr.bf16.mxu0 0
  %607 = vmatmul.mubr.bf16.gmra.mrb[0].mxu0 %v259
  %v608 = vpop.f32.mrb[0].mxu0
  %v609 = vadd.f32 %v100, %v608
  %v610 = vpop.f32.mrb[0].mxu0
  %v611 = vpop.f32.mrb[0].mxu0
  %v612 = vadd.f32 %v100, %v611
  %v613 = vpop.f32.mrb[0].mxu0
  %614 = vmatprep.mubr.bf16.mxu0 0
  %615 = vmatmul.mubr.bf16.gmra.mrb[0].mxu0 %v260
  %v616 = vpop.f32.mrb[0].mxu0
  %v617 = vadd.f32 %v100, %v616
  %v618 = vpop.f32.mrb[0].mxu0
  %v619 = vpop.f32.mrb[0].mxu0
  %v620 = vadd.f32 %v100, %v619
  %v621 = vpop.f32.mrb[0].mxu0
  %622 = vmatprep.mubr.bf16.mxu0 0
  %623 = vmatmul.mubr.bf16.gmra.mrb[0].mxu0 %v261
  %v624 = vpop.f32.mrb[0].mxu0
  %v625 = vadd.f32 %v100, %v624
  %v626 = vpop.f32.mrb[0].mxu0
  %v627 = vpop.f32.mrb[0].mxu0
  %v628 = vadd.f32 %v100, %v627
  %v629 = vpop.f32.mrb[0].mxu0
  %630 = vdwg.mxu0
  %v631 = vmax.f32 %v377, 0.0
  %v632 = vmax.f32 %v380, 0.0
  %v633 = vmax.f32 %v385, 0.0
  %v634 = vmax.f32 %v388, 0.0
  %v635 = vmax.f32 %v393, 0.0
  %v636 = vmax.f32 %v396, 0.0
  %v637 = vmax.f32 %v401, 0.0
  %v638 = vmax.f32 %v404, 0.0
  %v639 = vmax.f32 %v409, 0.0
  %v640 = vmax.f32 %v412, 0.0
  %v641 = vmax.f32 %v417, 0.0
  %v642 = vmax.f32 %v420, 0.0
  %v643 = vmax.f32 %v425, 0.0
  %v644 = vmax.f32 %v428, 0.0
  %v645 = vmax.f32 %v433, 0.0
  %v646 = vmax.f32 %v436, 0.0
  %v647 = vmax.f32 %v441, 0.0
  %v648 = vmax.f32 %v444, 0.0
  %v649 = vmax.f32 %v449, 0.0
  %v650 = vmax.f32 %v452, 0.0
  %v651 = vmax.f32 %v457, 0.0
  %v652 = vmax.f32 %v460, 0.0
  %v653 = vmax.f32 %v465, 0.0
  %v654 = vmax.f32 %v468, 0.0
  %v655 = vmax.f32 %v473, 0.0
  %v656 = vmax.f32 %v476, 0.0
  %v657 = vmax.f32 %v481, 0.0
  %v658 = vmax.f32 %v484, 0.0
  %v659 = vmax.f32 %v489, 0.0
  %v660 = vmax.f32 %v492, 0.0
  %v661 = vmax.f32 %v497, 0.0
  %v662 = vmax.f32 %v500, 0.0
  %v663 = vmax.f32 %v505, 0.0
  %v664 = vmax.f32 %v508, 0.0
  %v665 = vmax.f32 %v513, 0.0
  %v666 = vmax.f32 %v516, 0.0
  %v667 = vmax.f32 %v521, 0.0
  %v668 = vmax.f32 %v524, 0.0
  %v669 = vmax.f32 %v529, 0.0
  %v670 = vmax.f32 %v532, 0.0
  %v671 = vmax.f32 %v537, 0.0
  %v672 = vmax.f32 %v540, 0.0
  %v673 = vmax.f32 %v545, 0.0
  %v674 = vmax.f32 %v548, 0.0
  %v675 = vmax.f32 %v553, 0.0
  %v676 = vmax.f32 %v556, 0.0
  %v677 = vmax.f32 %v561, 0.0
  %v678 = vmax.f32 %v564, 0.0
  %v679 = vmax.f32 %v569, 0.0
  %v680 = vmax.f32 %v572, 0.0
  %v681 = vmax.f32 %v577, 0.0
  %v682 = vmax.f32 %v580, 0.0
  %v683 = vmax.f32 %v585, 0.0
  %v684 = vmax.f32 %v588, 0.0
  %v685 = vmax.f32 %v593, 0.0
  %v686 = vmax.f32 %v596, 0.0
  %v687 = vmax.f32 %v601, 0.0
  %v688 = vmax.f32 %v604, 0.0
  %v689 = vmax.f32 %v609, 0.0
  %v690 = vmax.f32 %v612, 0.0
  %v691 = vmax.f32 %v617, 0.0
  %v692 = vmax.f32 %v620, 0.0
  %v693 = vmax.f32 %v625, 0.0
  %v694 = vmax.f32 %v628, 0.0
  %v695 = vunpack.c.l.bf16 %v15
  %v696 = vunpack.c.l.bf16 %v16
  %v697 = vunpack.c.l.bf16 %v17
  %v698 = vunpack.c.l.bf16 %v18
  %v699 = vunpack.c.l.bf16 %v19
  %v700 = vunpack.c.l.bf16 %v20
  %v701 = vunpack.c.l.bf16 %v21
  %v702 = vunpack.c.l.bf16 %v22
  %v703 = vunpack.c.l.bf16 %v23
  %v704 = vunpack.c.l.bf16 %v24
  %v705 = vunpack.c.l.bf16 %v25
  %v706 = vunpack.c.l.bf16 %v26
  %v707 = vunpack.c.l.bf16 %v27
  %v708 = vunpack.c.l.bf16 %v28
  %v709 = vunpack.c.l.bf16 %v29
  %v710 = vunpack.c.l.bf16 %v30
  %v711 = vunpack.c.l.bf16 %v31
  %v712 = vunpack.c.l.bf16 %v32
  %v713 = vunpack.c.l.bf16 %v33
  %v714 = vunpack.c.l.bf16 %v34
  %v715 = vunpack.c.l.bf16 %v35
  %v716 = vunpack.c.l.bf16 %v36
  %v717 = vunpack.c.l.bf16 %v37
  %v718 = vunpack.c.l.bf16 %v38
  %v719 = vunpack.c.l.bf16 %v39
  %v720 = vunpack.c.l.bf16 %v40
  %v721 = vunpack.c.l.bf16 %v41
  %v722 = vunpack.c.l.bf16 %v42
  %v723 = vunpack.c.l.bf16 %v43
  %v724 = vunpack.c.l.bf16 %v44
  %v725 = vunpack.c.l.bf16 %v45
  %v726 = vunpack.c.l.bf16 %v46
  %v727 = vunpack.c.l.bf16 %v47
  %v728 = vunpack.c.l.bf16 %v48
  %v729 = vunpack.c.l.bf16 %v49
  %v730 = vunpack.c.l.bf16 %v50
  %v731 = vunpack.c.l.bf16 %v51
  %v732 = vunpack.c.l.bf16 %v52
  %v733 = vunpack.c.l.bf16 %v53
  %v734 = vunpack.c.l.bf16 %v54
  %v735 = vunpack.c.l.bf16 %v55
  %v736 = vunpack.c.l.bf16 %v56
  %v737 = vunpack.c.l.bf16 %v57
  %v738 = vunpack.c.l.bf16 %v58
  %v739 = vunpack.c.l.bf16 %v59
  %v740 = vunpack.c.l.bf16 %v60
  %v741 = vunpack.c.l.bf16 %v61
  %v742 = vunpack.c.l.bf16 %v62
  %v743 = vunpack.c.l.bf16 %v63
  %v744 = vunpack.c.l.bf16 %v64
  %v745 = vunpack.c.l.bf16 %v65
  %v746 = vunpack.c.l.bf16 %v66
  %v747 = vunpack.c.l.bf16 %v67
  %v748 = vunpack.c.l.bf16 %v68
  %v749 = vunpack.c.l.bf16 %v69
  %v750 = vunpack.c.l.bf16 %v70
  %v751 = vunpack.c.l.bf16 %v71
  %v752 = vunpack.c.l.bf16 %v72
  %v753 = vunpack.c.l.bf16 %v73
  %v754 = vunpack.c.l.bf16 %v74
  %v755 = vunpack.c.l.bf16 %v75
  %v756 = vunpack.c.l.bf16 %v76
  %v757 = vunpack.c.l.bf16 %v77
  %v758 = vunpack.c.l.bf16 %v78
  %v759 = vadd.f32 %v631, %v695
  %v760 = vadd.f32 %v632, %v696
  %v761 = vadd.f32 %v633, %v697
  %v762 = vadd.f32 %v634, %v698
  %v763 = vadd.f32 %v635, %v699
  %v764 = vadd.f32 %v636, %v700
  %v765 = vadd.f32 %v637, %v701
  %v766 = vadd.f32 %v638, %v702
  %v767 = vadd.f32 %v639, %v703
  %v768 = vadd.f32 %v640, %v704
  %v769 = vadd.f32 %v641, %v705
  %v770 = vadd.f32 %v642, %v706
  %v771 = vadd.f32 %v643, %v707
  %v772 = vadd.f32 %v644, %v708
  %v773 = vadd.f32 %v645, %v709
  %v774 = vadd.f32 %v646, %v710
  %v775 = vadd.f32 %v647, %v711
  %v776 = vadd.f32 %v648, %v712
  %v777 = vadd.f32 %v649, %v713
  %v778 = vadd.f32 %v650, %v714
  %v779 = vadd.f32 %v651, %v715
  %v780 = vadd.f32 %v652, %v716
  %v781 = vadd.f32 %v653, %v717
  %v782 = vadd.f32 %v654, %v718
  %v783 = vadd.f32 %v655, %v719
  %v784 = vadd.f32 %v656, %v720
  %v785 = vadd.f32 %v657, %v721
  %v786 = vadd.f32 %v658, %v722
  %v787 = vadd.f32 %v659, %v723
  %v788 = vadd.f32 %v660, %v724
  %v789 = vadd.f32 %v661, %v725
  %v790 = vadd.f32 %v662, %v726
  %v791 = vadd.f32 %v663, %v727
  %v792 = vadd.f32 %v664, %v728
  %v793 = vadd.f32 %v665, %v729
  %v794 = vadd.f32 %v666, %v730
  %v795 = vadd.f32 %v667, %v731
  %v796 = vadd.f32 %v668, %v732
  %v797 = vadd.f32 %v669, %v733
  %v798 = vadd.f32 %v670, %v734
  %v799 = vadd.f32 %v671, %v735
  %v800 = vadd.f32 %v672, %v736
  %v801 = vadd.f32 %v673, %v737
  %v802 = vadd.f32 %v674, %v738
  %v803 = vadd.f32 %v675, %v739
  %v804 = vadd.f32 %v676, %v740
  %v805 = vadd.f32 %v677, %v741
  %v806 = vadd.f32 %v678, %v742
  %v807 = vadd.f32 %v679, %v743
  %v808 = vadd.f32 %v680, %v744
  %v809 = vadd.f32 %v681, %v745
  %v810 = vadd.f32 %v682, %v746
  %v811 = vadd.f32 %v683, %v747
  %v812 = vadd.f32 %v684, %v748
  %v813 = vadd.f32 %v685, %v749
  %v814 = vadd.f32 %v686, %v750
  %v815 = vadd.f32 %v687, %v751
  %v816 = vadd.f32 %v688, %v752
  %v817 = vadd.f32 %v689, %v753
  %v818 = vadd.f32 %v690, %v754
  %v819 = vadd.f32 %v691, %v755
  %v820 = vadd.f32 %v692, %v756
  %v821 = vadd.f32 %v693, %v757
  %v822 = vadd.f32 %v694, %v758
  %823 = vst [vmem:[%s3] sm:$0xff] %v759
  %824 = vst [vmem:[%s3 + $0x8] sm:$0xff] %v760
  %825 = vst [vmem:[%s3 + $0x10] sm:$0xff] %v761
  %826 = vst [vmem:[%s3 + $0x18] sm:$0xff] %v762
  %827 = vst [vmem:[%s3 + $0x20] sm:$0xff] %v763
  %828 = vst [vmem:[%s3 + $0x28] sm:$0xff] %v764
  %829 = vst [vmem:[%s3 + $0x30] sm:$0xff] %v765
  %830 = vst [vmem:[%s3 + $0x38] sm:$0xff] %v766
  %831 = vst [vmem:[%s3 + $0x40] sm:$0xff] %v767
  %832 = vst [vmem:[%s3 + $0x48] sm:$0xff] %v768
  %833 = vst [vmem:[%s3 + $0x50] sm:$0xff] %v769
  %834 = vst [vmem:[%s3 + $0x58] sm:$0xff] %v770
  %835 = vst [vmem:[%s3 + $0x60] sm:$0xff] %v771
  %836 = vst [vmem:[%s3 + $0x68] sm:$0xff] %v772
  %837 = vst [vmem:[%s3 + $0x70] sm:$0xff] %v773
  %838 = vst [vmem:[%s3 + $0x78] sm:$0xff] %v774
  %839 = vst [vmem:[%s3 + $0x80] sm:$0xff] %v775
  %840 = vst [vmem:[%s3 + $0x88] sm:$0xff] %v776
  %841 = vst [vmem:[%s3 + $0x90] sm:$0xff] %v777
  %842 = vst [vmem:[%s3 + $0x98] sm:$0xff] %v778
  %843 = vst [vmem:[%s3 + $0xa0] sm:$0xff] %v779
  %844 = vst [vmem:[%s3 + $0xa8] sm:$0xff] %v780
  %845 = vst [vmem:[%s3 + $0xb0] sm:$0xff] %v781
  %846 = vst [vmem:[%s3 + $0xb8] sm:$0xff] %v782
  %847 = vst [vmem:[%s3 + $0xc0] sm:$0xff] %v783
  %848 = vst [vmem:[%s3 + $0xc8] sm:$0xff] %v784
  %849 = vst [vmem:[%s3 + $0xd0] sm:$0xff] %v785
  %850 = vst [vmem:[%s3 + $0xd8] sm:$0xff] %v786
  %851 = vst [vmem:[%s3 + $0xe0] sm:$0xff] %v787
  %852 = vst [vmem:[%s3 + $0xe8] sm:$0xff] %v788
  %853 = vst [vmem:[%s3 + $0xf0] sm:$0xff] %v789
  %854 = vst [vmem:[%s3 + $0xf8] sm:$0xff] %v790
  %855 = vst [vmem:[%s3 + $0x100] sm:$0xff] %v791
  %856 = vst [vmem:[%s3 + $0x108] sm:$0xff] %v792
  %857 = vst [vmem:[%s3 + $0x110] sm:$0xff] %v793
  %858 = vst [vmem:[%s3 + $0x118] sm:$0xff] %v794
  %859 = vst [vmem:[%s3 + $0x120] sm:$0xff] %v795
  %860 = vst [vmem:[%s3 + $0x128] sm:$0xff] %v796
  %861 = vst [vmem:[%s3 + $0x130] sm:$0xff] %v797
  %862 = vst [vmem:[%s3 + $0x138] sm:$0xff] %v798
  %863 = vst [vmem:[%s3 + $0x140] sm:$0xff] %v799
  %864 = vst [vmem:[%s3 + $0x148] sm:$0xff] %v800
  %865 = vst [vmem:[%s3 + $0x150] sm:$0xff] %v801
  %866 = vst [vmem:[%s3 + $0x158] sm:$0xff] %v802
  %867 = vst [vmem:[%s3 + $0x160] sm:$0xff] %v803
  %868 = vst [vmem:[%s3 + $0x168] sm:$0xff] %v804
  %869 = vst [vmem:[%s3 + $0x170] sm:$0xff] %v805
  %870 = vst [vmem:[%s3 + $0x178] sm:$0xff] %v806
  %871 = vst [vmem:[%s3 + $0x180] sm:$0xff] %v807
  %872 = vst [vmem:[%s3 + $0x188] sm:$0xff] %v808
  %873 = vst [vmem:[%s3 + $0x190] sm:$0xff] %v809
  %874 = vst [vmem:[%s3 + $0x198] sm:$0xff] %v810
  %875 = vst [vmem:[%s3 + $0x1a0] sm:$0xff] %v811
  %876 = vst [vmem:[%s3 + $0x1a8] sm:$0xff] %v812
  %877 = vst [vmem:[%s3 + $0x1b0] sm:$0xff] %v813
  %878 = vst [vmem:[%s3 + $0x1b8] sm:$0xff] %v814
  %879 = vst [vmem:[%s3 + $0x1c0] sm:$0xff] %v815
  %880 = vst [vmem:[%s3 + $0x1c8] sm:$0xff] %v816
  %881 = vst [vmem:[%s3 + $0x1d0] sm:$0xff] %v817
  %882 = vst [vmem:[%s3 + $0x1d8] sm:$0xff] %v818
  %883 = vst [vmem:[%s3 + $0x1e0] sm:$0xff] %v819
  %884 = vst [vmem:[%s3 + $0x1e8] sm:$0xff] %v820
  %885 = vst [vmem:[%s3 + $0x1f0] sm:$0xff] %v821
  %886 = vst [vmem:[%s3 + $0x1f8] sm:$0xff] %v822
  // Predicated region
  $region14: #{conv_layer_apply.1} parent=0 // pred_check
    _
  $region15: #{conv_layer_apply.1} parent=0 // pred_check_branch
    %888 = sbr.rel (0) target = $region17
  $region16: #{conv_layer_apply.1} parent=0 // pred_region
    _
  $region17: #{conv_layer_apply.1} parent=0 // pred_fallthru
    _
  // Predicated region
  $region18: #{conv_layer_apply.1} parent=0 // pred_check
    _
  $region19: #{conv_layer_apply.1} parent=0 // pred_check_branch
    %890 = sbr.rel (0) target = $region21
  $region20: #{conv_layer_apply.1} parent=0 // pred_region
    _
  $region21: #{conv_layer_apply.1} parent=0 // pred_fallthru
    _

</llo_original>
